<compile_context>
chip_gen: v7x
topology: tpu7x:2x2x1
jax: 0.10.0
libtpu: 0.0.40
codegen_flags: <defaults>
</compile_context>

<pallas_src>
import jax
import jax.numpy as jnp
from jax.experimental import pallas as pl
from jax.experimental.pallas import tpu as pltpu


def _round_up(x, m):
    return ((x + m - 1) // m) * m


def _cdiv(a, b):
    return (a + b - 1) // b


def _mlp_kernel(x_ref, w1_ref, b1_ref, w2_ref, b2_ref, o_ref):
    # hidden = relu(x @ w1 + b1)
    h = jnp.dot(x_ref[...], w1_ref[...], preferred_element_type=jnp.float32) + b1_ref[...]
    h = jnp.maximum(h, 0.0)
    # logits = h @ w2 + b2
    logits = jnp.dot(h, w2_ref[...], preferred_element_type=jnp.float32) + b2_ref[...]
    # numerically stable softmax over dim=1 (matches F.softmax(..., dim=1))
    m = jnp.max(logits, axis=1, keepdims=True)
    e = jnp.exp(logits - m)
    denom = jnp.sum(e, axis=1, keepdims=True)
    o_ref[...] = e * pl.reciprocal(denom, approx=False)


def net_mlp_forward(x, w1, b1, w2, b2, *, block_b=2048):
    """x: (B, 1, 32, 32) / (B, 32, 32) / (B, 1024) float32.

    Returns softmax probabilities of shape (B, nb_classes).
    """
    B = x.shape[0]
    x2d = x.reshape(B, 32 * 32).astype(jnp.float32)  # == torch x.view(-1, 1024)
    H = w1.shape[1]
    C = w2.shape[1]

    # Batch tiling: at least 2 grid steps (so v7x's 2 TensorCores both get
    # work on the "parallel" axis), TB a multiple of 8 sublanes, capped at
    # block_b so double-buffered x tiles stay well inside VMEM everywhere.
    n_steps = max(2, _cdiv(B, block_b))
    TB = max(8, min(block_b, _round_up(_cdiv(B, n_steps), 8)))
    grid = (_cdiv(B, TB),)

    flops = 2 * B * (32 * 32) * H + 2 * B * H * C
    bytes_accessed = 4 * (B * 32 * 32 + 32 * 32 * H + H + H * C + C + B * C)
    transcendentals = B * C  # exp in the softmax

    out = pl.pallas_call(
        _mlp_kernel,
        out_shape=jax.ShapeDtypeStruct((B, C), jnp.float32),
        grid_spec=pl.GridSpec(
            grid=grid,
            in_specs=[
                # x tile marches over the batch (double-buffered by Pallas).
                # TODO(synk): if DMA is still exposed on v7x at TB=2048, add
                # pipeline_mode=pl.Buffered(3) on this spec only.
                pl.BlockSpec((TB, 32 * 32), lambda i: (i, 0)),
                # Weights/biases: constant block index -> fetched once and
                # VMEM-resident for the whole grid.
                pl.BlockSpec((32 * 32, H), lambda i: (0, 0)),
                pl.BlockSpec((1, H), lambda i: (0, 0)),
                pl.BlockSpec((H, C), lambda i: (0, 0)),
                pl.BlockSpec((1, C), lambda i: (0, 0)),
            ],
            out_specs=pl.BlockSpec((TB, C), lambda i: (i, 0)),
        ),
        compiler_params=pltpu.CompilerParams(
            dimension_semantics=("parallel",),
            vmem_limit_bytes=48 << 20,
        ),
        cost_estimate=pl.CostEstimate(
            flops=flops,
            transcendentals=transcendentals,
            bytes_accessed=bytes_accessed),
    )(x2d, w1, b1, w2, b2)

    return out


def init_params(key, hiddencells=128, nb_classes=16):
    """Deterministic synthetic init (shapes match nn.Linear(1024,H), nn.Linear(H,C))."""
    k1, k2, k3, k4 = jax.random.split(key, 4)
    in1 = 32 * 32
    w1 = jax.random.uniform(k1, (in1, hiddencells), jnp.float32,
                            -1.0 / jnp.sqrt(in1), 1.0 / jnp.sqrt(in1))
    b1 = jax.random.uniform(k2, (1, hiddencells), jnp.float32,
                            -1.0 / jnp.sqrt(in1), 1.0 / jnp.sqrt(in1))
    w2 = jax.random.uniform(k3, (hiddencells, nb_classes), jnp.float32,
                            -1.0 / jnp.sqrt(hiddencells), 1.0 / jnp.sqrt(hiddencells))
    b2 = jax.random.uniform(k4, (1, nb_classes), jnp.float32,
                            -1.0 / jnp.sqrt(hiddencells), 1.0 / jnp.sqrt(hiddencells))
    return w1, b1, w2, b2


if __name__ == "__main__":
    key = jax.random.PRNGKey(0)
    kx, kp = jax.random.split(key)

    B, H, C = 8, 128, 16          # small synthetic shapes; C stands in for len(classes)
    x = jax.random.normal(kx, (B, 1, 32, 32), jnp.float32)   # NCHW 32x32 "images"
    w1, b1, w2, b2 = init_params(kp, hiddencells=H, nb_classes=C)

    out = net_mlp_forward(x, w1, b1, w2, b2)
    out = jax.block_until_ready(out)

    # sanity check against pure-JAX reference
    x2d = x.reshape(B, 32 * 32)
    ref_h = jnp.maximum(x2d @ w1 + b1, 0.0)
    ref_logits = ref_h @ w2 + b2
    ref = jax.nn.softmax(ref_logits, axis=1)
    assert out.shape == (B, C)
    assert jnp.allclose(out, ref, atol=1e-5, rtol=1e-5)
    assert jnp.allclose(jnp.sum(out, axis=1), 1.0, atol=1e-5)

    # also exercise a non-divisible batch to check the ragged last-block path
    B2 = 13
    x2 = jax.random.normal(kx, (B2, 1, 32, 32), jnp.float32)
    out2 = jax.block_until_ready(net_mlp_forward(x2, w1, b1, w2, b2))
    ref2 = jax.nn.softmax(jnp.maximum(x2.reshape(B2, 1024) @ w1 + b1, 0.0) @ w2 + b2, axis=1)
    assert out2.shape == (B2, C)
    assert jnp.allclose(out2, ref2, atol=1e-5, rtol=1e-5)

    print("KERNEL_OK")
</pallas_src>

<mosaic_0001>
module attributes {stable_mosaic.version = 11 : i64} {
  func.func @_mlp_kernel(%arg0: i32, %arg1: memref<8x1024xf32, #tpu.memory_space<vmem>>, %arg2: memref<1024x128xf32, #tpu.memory_space<vmem>>, %arg3: memref<1x128xf32, #tpu.memory_space<vmem>>, %arg4: memref<128x16xf32, #tpu.memory_space<vmem>>, %arg5: memref<1x16xf32, #tpu.memory_space<vmem>>, %arg6: memref<8x16xf32, #tpu.memory_space<vmem>>) attributes {dimension_semantics = [#tpu.dimension_semantics<parallel>], iteration_bounds = array<i64: 1>, scalar_prefetch = 0 : i64, scratch_operands = 0 : i64, tpu.core_type = #tpu.core_type<tc>, window_params = [{transform_indices = @transform_0, window_bounds = array<i64: 8, 1024>}, {pipeline_mode = #tpu.pipeline_mode<synchronous>, transform_indices = @transform_1, window_bounds = array<i64: 1024, 128>}, {pipeline_mode = #tpu.pipeline_mode<synchronous>, transform_indices = @transform_2, window_bounds = array<i64: 1, 128>}, {pipeline_mode = #tpu.pipeline_mode<synchronous>, transform_indices = @transform_3, window_bounds = array<i64: 128, 16>}, {pipeline_mode = #tpu.pipeline_mode<synchronous>, transform_indices = @transform_4, window_bounds = array<i64: 1, 16>}, {transform_indices = @transform_5, window_bounds = array<i64: 8, 16>}]} {
    %c0 = arith.constant 0 : index
    %c0_0 = arith.constant 0 : index
    %0 = vector.load %arg1[%c0, %c0_0] : memref<8x1024xf32, #tpu.memory_space<vmem>>, vector<8x1024xf32>
    %c0_1 = arith.constant 0 : index
    %c0_2 = arith.constant 0 : index
    %1 = vector.load %arg2[%c0_1, %c0_2] : memref<1024x128xf32, #tpu.memory_space<vmem>>, vector<1024x128xf32>
    %cst = arith.constant dense<0.000000e+00> : vector<8x128xf32>
    %2 = tpu.matmul %0, %1, %cst {dimension_numbers = #tpu.dot_dimension_numbers<[1], [0], [0], [1], [0, 0, 1, 1], [], []>} : vector<8x1024xf32>, vector<1024x128xf32>, vector<8x128xf32> -> vector<8x128xf32>
    %c0_3 = arith.constant 0 : index
    %c0_4 = arith.constant 0 : index
    %3 = vector.load %arg3[%c0_3, %c0_4] : memref<1x128xf32, #tpu.memory_space<vmem>>, vector<1x128xf32>
    %4 = vector.broadcast %3 : vector<1x128xf32> to vector<8x128xf32>
    %5 = arith.addf %2, %4 : vector<8x128xf32>
    %cst_5 = arith.constant 0.000000e+00 : f32
    %6 = vector.broadcast %cst_5 : f32 to vector<8x128xf32>
    %7 = arith.maximumf %5, %6 : vector<8x128xf32>
    %c0_6 = arith.constant 0 : index
    %c0_7 = arith.constant 0 : index
    %8 = vector.load %arg4[%c0_6, %c0_7] : memref<128x16xf32, #tpu.memory_space<vmem>>, vector<128x16xf32>
    %cst_8 = arith.constant dense<0.000000e+00> : vector<8x16xf32>
    %9 = tpu.matmul %7, %8, %cst_8 {dimension_numbers = #tpu.dot_dimension_numbers<[1], [0], [0], [1], [0, 0, 1, 1], [], []>} : vector<8x128xf32>, vector<128x16xf32>, vector<8x16xf32> -> vector<8x16xf32>
    %c0_9 = arith.constant 0 : index
    %c0_10 = arith.constant 0 : index
    %10 = vector.load %arg5[%c0_9, %c0_10] : memref<1x16xf32, #tpu.memory_space<vmem>>, vector<1x16xf32>
    %11 = vector.broadcast %10 : vector<1x16xf32> to vector<8x16xf32>
    %12 = arith.addf %9, %11 : vector<8x16xf32>
    %cst_11 = arith.constant dense<0xFF800000> : vector<8xf32>
    %13 = vector.multi_reduction <maximumf>, %12, %cst_11 [1] : vector<8x16xf32> to vector<8xf32>
    %14 = vector.shape_cast %13 : vector<8xf32> to vector<8x1xf32>
    %15 = vector.broadcast %14 : vector<8x1xf32> to vector<8x16xf32>
    %16 = arith.subf %12, %15 : vector<8x16xf32>
    %17 = math.exp %16 : vector<8x16xf32>
    %cst_12 = arith.constant dense<0.000000e+00> : vector<8xf32>
    %18 = vector.multi_reduction <add>, %17, %cst_12 [1] : vector<8x16xf32> to vector<8xf32>
    %19 = vector.shape_cast %18 : vector<8xf32> to vector<8x1xf32>
    %20 = tpu.reciprocal %19 : vector<8x1xf32> -> vector<8x1xf32>
    %21 = vector.broadcast %20 : vector<8x1xf32> to vector<8x16xf32>
    %22 = arith.mulf %17, %21 : vector<8x16xf32>
    %c0_13 = arith.constant 0 : index
    %c0_14 = arith.constant 0 : index
    %23 = vector.load %arg6[%c0_13, %c0_14] : memref<8x16xf32, #tpu.memory_space<vmem>>, vector<8x16xf32>
    tpu.vector_store %arg6[%c0_13, %c0_14], %22 {strides = array<i32>} : memref<8x16xf32, #tpu.memory_space<vmem>>, vector<8x16xf32>,
    return
  }
  func.func @transform_0(%arg0: i32) -> (i32, i32) {
    %c0_i32 = arith.constant 0 : i32
    %c0_i32_0 = arith.constant 0 : i32
    return %arg0, %c0_i32 : i32, i32
  }
  func.func @transform_1(%arg0: i32) -> (i32, i32) {
    %c0_i32 = arith.constant 0 : i32
    %c0_i32_0 = arith.constant 0 : i32
    %c0_i32_1 = arith.constant 0 : i32
    return %c0_i32, %c0_i32_0 : i32, i32
  }
  func.func @transform_2(%arg0: i32) -> (i32, i32) {
    %c0_i32 = arith.constant 0 : i32
    %c0_i32_0 = arith.constant 0 : i32
    %c0_i32_1 = arith.constant 0 : i32
    return %c0_i32, %c0_i32_0 : i32, i32
  }
  func.func @transform_3(%arg0: i32) -> (i32, i32) {
    %c0_i32 = arith.constant 0 : i32
    %c0_i32_0 = arith.constant 0 : i32
    %c0_i32_1 = arith.constant 0 : i32
    return %c0_i32, %c0_i32_0 : i32, i32
  }
  func.func @transform_4(%arg0: i32) -> (i32, i32) {
    %c0_i32 = arith.constant 0 : i32
    %c0_i32_0 = arith.constant 0 : i32
    %c0_i32_1 = arith.constant 0 : i32
    return %c0_i32, %c0_i32_0 : i32, i32
  }
  func.func @transform_5(%arg0: i32) -> (i32, i32) {
    %c0_i32 = arith.constant 0 : i32
    %c0_i32_0 = arith.constant 0 : i32
    return %arg0, %c0_i32 : i32, i32
  }
}

</mosaic_0001>

<llo_original>
// kernel: tpu_custom_call.1
$region0: #{tpu_custom_call.1}
  #allocation0 [shape = 'u32[]', space=smem, size = 0x4, offset = 0x4, fixed_abs, tag = 'smem constant byte address 0x4 - core index']
  #allocation1 [shape = 'u32[144,128]{1,0:T(1,128)}', space=vmem, size = 0x12000, scoped, tag = 'internal scratch']
  %s0 = inlined_call_operand.vmem [shape: f32[8,1024], index: 0, kind: input, shape index: {}]
  %s1 = inlined_call_operand.hbm [shape: f32[1024,128], index: 1, kind: input, shape index: {}]
  %s2 = inlined_call_operand.vmem [shape: f32[1,128], index: 2, kind: input, shape index: {}]
  %s3 = inlined_call_operand.vmem [shape: f32[128,16], index: 3, kind: input, shape index: {}]
  %s4 = inlined_call_operand.vmem [shape: f32[1,16], index: 4, kind: input, shape index: {}]
  %s5 = inlined_call_operand.hbm [shape: f32[8,16], index: 5, kind: output, shape index: {}]
  %s6 = sld [smem:[#allocation0]]
  $region34: #{tpu_custom_call.1} parent=0
    _
  %s8 = ssub.s32 1, %s6
  %s9 = scalar_select 0, %s8, %s6
  $region1: #{tpu_custom_call.1} parent=0
    #allocation2 [shape = 'u8[524288]{0}', space=vmem, size = 0x80000, scoped, tag = 'input window, operand 1, single buffered']
    #allocation3 [shape = 's32[1]{0}', space=sflag, size = 0x4, scoped, tag = 'scoped memory for tpu_custom_call.1']
    #allocation4 [shape = 's32[1]{0}', space=sflag, size = 0x4, scoped, tag = 'scoped memory for tpu_custom_call.1']
    #allocation5 [shape = 'u8[4096]{0}', space=vmem, size = 0x1000, scoped, tag = 'output window, operand 0, single buffered']
    %10 = vsyncpa [#allocation3], 0
    %11 = vsyncpa [#allocation4], 0
    // Predicated region
    $region2: #{tpu_custom_call.1} parent=1 // pred_check
      _
    $region3: #{tpu_custom_call.1} parent=1 // pred_check_branch
      %13 = sbr.rel (0) target = $region5
    $region4: #{tpu_custom_call.1} parent=1 // pred_region
      _
    $region5: #{tpu_custom_call.1} parent=1 // pred_fallthru
      _
    // Predicated region
    $region6: #{tpu_custom_call.1} parent=1 // pred_check
      _
    $region7: #{tpu_custom_call.1} parent=1 // pred_check_branch
      %15 = sbr.rel (0) target = $region9
    $region8: #{tpu_custom_call.1} parent=1 // pred_region
      %s17 = ssub.s32 16384, 16384
      %18 = vsyncadd [#allocation3], %s17
      %s19 = sshll.u32 [#allocation2], 4
      %s20 = int_to_ptr.vmem [resolvable:$true] %s19
      %25 = dma.hbm_to_vmem [thread:$0]  %s1, 16384, %s20, [#allocation3], 128, 128, 8
    $region9: #{tpu_custom_call.1} parent=1 // pred_fallthru
      _
    // Predicated region
    $region10: #{tpu_custom_call.1} parent=1 // pred_check
      _
    $region11: #{tpu_custom_call.1} parent=1 // pred_check_branch
      %27 = sbr.rel (0) target = $region13
    $region12: #{tpu_custom_call.1} parent=1 // pred_region
      _
    $region13: #{tpu_custom_call.1} parent=1 // pred_fallthru
      _
    // Predicated region
    $region14: #{tpu_custom_call.1} parent=1 // pred_check
      _
    $region15: #{tpu_custom_call.1} parent=1 // pred_check_branch
      %29 = sbr.rel (0) target = $region17
    $region16: #{tpu_custom_call.1} parent=1 // pred_region
      _
    $region17: #{tpu_custom_call.1} parent=1 // pred_fallthru
      _
    // Predicated region
    $region18: #{tpu_custom_call.1} parent=1 // pred_check
      _
    $region19: #{tpu_custom_call.1} parent=1 // pred_check_branch
      %31 = sbr.rel (0) target = $region21
    $region20: #{tpu_custom_call.1} parent=1 // pred_region
      _
    $region21: #{tpu_custom_call.1} parent=1 // pred_fallthru
      _
    // Predicated region
    $region22: #{tpu_custom_call.1} parent=1 // pred_check
      _
    $region23: #{tpu_custom_call.1} parent=1 // pred_check_branch
      %33 = sbr.rel (0) target = $region25
    $region24: #{tpu_custom_call.1} parent=1 // pred_region
      %34 = dma.done [#allocation3], 16384
    $region25: #{tpu_custom_call.1} parent=1 // pred_fallthru
      _
    %v35 = vld [vmem:[%s0] sm:$0xff]
    %v36 = vld [vmem:[%s0 + $0x8] sm:$0xff]
    %v37 = vld [vmem:[%s0 + $0x10] sm:$0xff]
    %v38 = vld [vmem:[%s0 + $0x18] sm:$0xff]
    %v39 = vld [vmem:[%s0 + $0x20] sm:$0xff]
    %v40 = vld [vmem:[%s0 + $0x28] sm:$0xff]
    %v41 = vld [vmem:[%s0 + $0x30] sm:$0xff]
    %v42 = vld [vmem:[%s0 + $0x38] sm:$0xff]
    %v43 = vld [vmem:[#allocation2] sm:$0xff]
    %v44 = vld [vmem:[#allocation2 + $0x8] sm:$0xff]
    %v45 = vld [vmem:[#allocation2 + $0x10] sm:$0xff]
    %v46 = vld [vmem:[#allocation2 + $0x18] sm:$0xff]
    %v47 = vld [vmem:[#allocation2 + $0x20] sm:$0xff]
    %v48 = vld [vmem:[#allocation2 + $0x28] sm:$0xff]
    %v49 = vld [vmem:[#allocation2 + $0x30] sm:$0xff]
    %v50 = vld [vmem:[#allocation2 + $0x38] sm:$0xff]
    %v51 = vld [vmem:[#allocation2 + $0x40] sm:$0xff]
    %v52 = vld [vmem:[#allocation2 + $0x48] sm:$0xff]
    %v53 = vld [vmem:[#allocation2 + $0x50] sm:$0xff]
    %v54 = vld [vmem:[#allocation2 + $0x58] sm:$0xff]
    %v55 = vld [vmem:[#allocation2 + $0x60] sm:$0xff]
    %v56 = vld [vmem:[#allocation2 + $0x68] sm:$0xff]
    %v57 = vld [vmem:[#allocation2 + $0x70] sm:$0xff]
    %v58 = vld [vmem:[#allocation2 + $0x78] sm:$0xff]
    %v59 = vld [vmem:[#allocation2 + $0x80] sm:$0xff]
    %v60 = vld [vmem:[#allocation2 + $0x88] sm:$0xff]
    %v61 = vld [vmem:[#allocation2 + $0x90] sm:$0xff]
    %v62 = vld [vmem:[#allocation2 + $0x98] sm:$0xff]
    %v63 = vld [vmem:[#allocation2 + $0xa0] sm:$0xff]
    %v64 = vld [vmem:[#allocation2 + $0xa8] sm:$0xff]
    %v65 = vld [vmem:[#allocation2 + $0xb0] sm:$0xff]
    %v66 = vld [vmem:[#allocation2 + $0xb8] sm:$0xff]
    %v67 = vld [vmem:[#allocation2 + $0xc0] sm:$0xff]
    %v68 = vld [vmem:[#allocation2 + $0xc8] sm:$0xff]
    %v69 = vld [vmem:[#allocation2 + $0xd0] sm:$0xff]
    %v70 = vld [vmem:[#allocation2 + $0xd8] sm:$0xff]
    %v71 = vld [vmem:[#allocation2 + $0xe0] sm:$0xff]
    %v72 = vld [vmem:[#allocation2 + $0xe8] sm:$0xff]
    %v73 = vld [vmem:[#allocation2 + $0xf0] sm:$0xff]
    %v74 = vld [vmem:[#allocation2 + $0xf8] sm:$0xff]
    %v75 = vld [vmem:[#allocation2 + $0x100] sm:$0xff]
    %v76 = vld [vmem:[#allocation2 + $0x108] sm:$0xff]
    %v77 = vld [vmem:[#allocation2 + $0x110] sm:$0xff]
    %v78 = vld [vmem:[#allocation2 + $0x118] sm:$0xff]
    %v79 = vld [vmem:[#allocation2 + $0x120] sm:$0xff]
    %v80 = vld [vmem:[#allocation2 + $0x128] sm:$0xff]
    %v81 = vld [vmem:[#allocation2 + $0x130] sm:$0xff]
    %v82 = vld [vmem:[#allocation2 + $0x138] sm:$0xff]
    %v83 = vld [vmem:[#allocation2 + $0x140] sm:$0xff]
    %v84 = vld [vmem:[#allocation2 + $0x148] sm:$0xff]
    %v85 = vld [vmem:[#allocation2 + $0x150] sm:$0xff]
    %v86 = vld [vmem:[#allocation2 + $0x158] sm:$0xff]
    %v87 = vld [vmem:[#allocation2 + $0x160] sm:$0xff]
    %v88 = vld [vmem:[#allocation2 + $0x168] sm:$0xff]
    %v89 = vld [vmem:[#allocation2 + $0x170] sm:$0xff]
    %v90 = vld [vmem:[#allocation2 + $0x178] sm:$0xff]
    %v91 = vld [vmem:[#allocation2 + $0x180] sm:$0xff]
    %v92 = vld [vmem:[#allocation2 + $0x188] sm:$0xff]
    %v93 = vld [vmem:[#allocation2 + $0x190] sm:$0xff]
    %v94 = vld [vmem:[#allocation2 + $0x198] sm:$0xff]
    %v95 = vld [vmem:[#allocation2 + $0x1a0] sm:$0xff]
    %v96 = vld [vmem:[#allocation2 + $0x1a8] sm:$0xff]
    %v97 = vld [vmem:[#allocation2 + $0x1b0] sm:$0xff]
    %v98 = vld [vmem:[#allocation2 + $0x1b8] sm:$0xff]
    %v99 = vld [vmem:[#allocation2 + $0x1c0] sm:$0xff]
    %v100 = vld [vmem:[#allocation2 + $0x1c8] sm:$0xff]
    %v101 = vld [vmem:[#allocation2 + $0x1d0] sm:$0xff]
    %v102 = vld [vmem:[#allocation2 + $0x1d8] sm:$0xff]
    %v103 = vld [vmem:[#allocation2 + $0x1e0] sm:$0xff]
    %v104 = vld [vmem:[#allocation2 + $0x1e8] sm:$0xff]
    %v105 = vld [vmem:[#allocation2 + $0x1f0] sm:$0xff]
    %v106 = vld [vmem:[#allocation2 + $0x1f8] sm:$0xff]
    %v107 = vld [vmem:[#allocation2 + $0x200] sm:$0xff]
    %v108 = vld [vmem:[#allocation2 + $0x208] sm:$0xff]
    %v109 = vld [vmem:[#allocation2 + $0x210] sm:$0xff]
    %v110 = vld [vmem:[#allocation2 + $0x218] sm:$0xff]
    %v111 = vld [vmem:[#allocation2 + $0x220] sm:$0xff]
    %v112 = vld [vmem:[#allocation2 + $0x228] sm:$0xff]
    %v113 = vld [vmem:[#allocation2 + $0x230] sm:$0xff]
    %v114 = vld [vmem:[#allocation2 + $0x238] sm:$0xff]
    %v115 = vld [vmem:[#allocation2 + $0x240] sm:$0xff]
    %v116 = vld [vmem:[#allocation2 + $0x248] sm:$0xff]
    %v117 = vld [vmem:[#allocation2 + $0x250] sm:$0xff]
    %v118 = vld [vmem:[#allocation2 + $0x258] sm:$0xff]
    %v119 = vld [vmem:[#allocation2 + $0x260] sm:$0xff]
    %v120 = vld [vmem:[#allocation2 + $0x268] sm:$0xff]
    %v121 = vld [vmem:[#allocation2 + $0x270] sm:$0xff]
    %v122 = vld [vmem:[#allocation2 + $0x278] sm:$0xff]
    %v123 = vld [vmem:[#allocation2 + $0x280] sm:$0xff]
    %v124 = vld [vmem:[#allocation2 + $0x288] sm:$0xff]
    %v125 = vld [vmem:[#allocation2 + $0x290] sm:$0xff]
    %v126 = vld [vmem:[#allocation2 + $0x298] sm:$0xff]
    %v127 = vld [vmem:[#allocation2 + $0x2a0] sm:$0xff]
    %v128 = vld [vmem:[#allocation2 + $0x2a8] sm:$0xff]
    %v129 = vld [vmem:[#allocation2 + $0x2b0] sm:$0xff]
    %v130 = vld [vmem:[#allocation2 + $0x2b8] sm:$0xff]
    %v131 = vld [vmem:[#allocation2 + $0x2c0] sm:$0xff]
    %v132 = vld [vmem:[#allocation2 + $0x2c8] sm:$0xff]
    %v133 = vld [vmem:[#allocation2 + $0x2d0] sm:$0xff]
    %v134 = vld [vmem:[#allocation2 + $0x2d8] sm:$0xff]
    %v135 = vld [vmem:[#allocation2 + $0x2e0] sm:$0xff]
    %v136 = vld [vmem:[#allocation2 + $0x2e8] sm:$0xff]
    %v137 = vld [vmem:[#allocation2 + $0x2f0] sm:$0xff]
    %v138 = vld [vmem:[#allocation2 + $0x2f8] sm:$0xff]
    %v139 = vld [vmem:[#allocation2 + $0x300] sm:$0xff]
    %v140 = vld [vmem:[#allocation2 + $0x308] sm:$0xff]
    %v141 = vld [vmem:[#allocation2 + $0x310] sm:$0xff]
    %v142 = vld [vmem:[#allocation2 + $0x318] sm:$0xff]
    %v143 = vld [vmem:[#allocation2 + $0x320] sm:$0xff]
    %v144 = vld [vmem:[#allocation2 + $0x328] sm:$0xff]
    %v145 = vld [vmem:[#allocation2 + $0x330] sm:$0xff]
    %v146 = vld [vmem:[#allocation2 + $0x338] sm:$0xff]
    %v147 = vld [vmem:[#allocation2 + $0x340] sm:$0xff]
    %v148 = vld [vmem:[#allocation2 + $0x348] sm:$0xff]
    %v149 = vld [vmem:[#allocation2 + $0x350] sm:$0xff]
    %v150 = vld [vmem:[#allocation2 + $0x358] sm:$0xff]
    %v151 = vld [vmem:[#allocation2 + $0x360] sm:$0xff]
    %v152 = vld [vmem:[#allocation2 + $0x368] sm:$0xff]
    %v153 = vld [vmem:[#allocation2 + $0x370] sm:$0xff]
    %v154 = vld [vmem:[#allocation2 + $0x378] sm:$0xff]
    %v155 = vld [vmem:[#allocation2 + $0x380] sm:$0xff]
    %v156 = vld [vmem:[#allocation2 + $0x388] sm:$0xff]
    %v157 = vld [vmem:[#allocation2 + $0x390] sm:$0xff]
    %v158 = vld [vmem:[#allocation2 + $0x398] sm:$0xff]
    %v159 = vld [vmem:[#allocation2 + $0x3a0] sm:$0xff]
    %v160 = vld [vmem:[#allocation2 + $0x3a8] sm:$0xff]
    %v161 = vld [vmem:[#allocation2 + $0x3b0] sm:$0xff]
    %v162 = vld [vmem:[#allocation2 + $0x3b8] sm:$0xff]
    %v163 = vld [vmem:[#allocation2 + $0x3c0] sm:$0xff]
    %v164 = vld [vmem:[#allocation2 + $0x3c8] sm:$0xff]
    %v165 = vld [vmem:[#allocation2 + $0x3d0] sm:$0xff]
    %v166 = vld [vmem:[#allocation2 + $0x3d8] sm:$0xff]
    %v167 = vld [vmem:[#allocation2 + $0x3e0] sm:$0xff]
    %v168 = vld [vmem:[#allocation2 + $0x3e8] sm:$0xff]
    %v169 = vld [vmem:[#allocation2 + $0x3f0] sm:$0xff]
    %v170 = vld [vmem:[#allocation2 + $0x3f8] sm:$0xff]
    %v171 = vld [vmem:[%s2] sm:$0x1]
    %v173 = vlaneseq
    %v174 = vshrl.u32 %v173, 7
    %v175 = vsub.s32 0, %v174
    %v176 = vrot.slane %v171, %v175
    %178 = vmatprep.subr.mxu0 0.0
    %179 = vmatpush1.msra.mxu0 %v43
    %180 = vmatprep.subr.mxu0 0.0
    %181 = vmatpush1.msra.mxu0 %v44
    %182 = vmatprep.subr.mxu0 0.0
    %183 = vmatpush1.msra.mxu0 %v45
    %184 = vmatprep.subr.mxu0 0.0
    %185 = vmatpush1.msra.mxu0 %v46
    %186 = vmatprep.subr.mxu0 0.0
    %187 = vmatpush1.msra.mxu0 %v47
    %188 = vmatprep.subr.mxu0 0.0
    %189 = vmatpush1.msra.mxu0 %v48
    %190 = vmatprep.subr.mxu0 0.0
    %191 = vmatpush1.msra.mxu0 %v49
    %192 = vmatprep.subr.mxu0 0.0
    %193 = vmatpush1.msra.mxu0 %v50
    %194 = vmatprep.subr.mxu0 0.0
    %195 = vmatpush1.msra.mxu0 %v51
    %196 = vmatprep.subr.mxu0 0.0
    %197 = vmatpush1.msra.mxu0 %v52
    %198 = vmatprep.subr.mxu0 0.0
    %199 = vmatpush1.msra.mxu0 %v53
    %200 = vmatprep.subr.mxu0 0.0
    %201 = vmatpush1.msra.mxu0 %v54
    %202 = vmatprep.subr.mxu0 0.0
    %203 = vmatpush1.msra.mxu0 %v55
    %204 = vmatprep.subr.mxu0 0.0
    %205 = vmatpush1.msra.mxu0 %v56
    %206 = vmatprep.subr.mxu0 0.0
    %207 = vmatpush1.msra.mxu0 %v57
    %208 = vmatprep.subr.mxu0 0.0
    %209 = vmatpush1.msra.mxu0 %v58
    %210 = vmatprep.subr.mxu0 0.0
    %211 = vmatpush1.msra.mxu0 %v59
    %212 = vmatprep.subr.mxu0 0.0
    %213 = vmatpush1.msra.mxu0 %v60
    %214 = vmatprep.subr.mxu0 0.0
    %215 = vmatpush1.msra.mxu0 %v61
    %216 = vmatprep.subr.mxu0 0.0
    %217 = vmatpush1.msra.mxu0 %v62
    %218 = vmatprep.subr.mxu0 0.0
    %219 = vmatpush1.msra.mxu0 %v63
    %220 = vmatprep.subr.mxu0 0.0
    %221 = vmatpush1.msra.mxu0 %v64
    %222 = vmatprep.subr.mxu0 0.0
    %223 = vmatpush1.msra.mxu0 %v65
    %224 = vmatprep.subr.mxu0 0.0
    %225 = vmatpush1.msra.mxu0 %v66
    %226 = vmatprep.subr.mxu0 0.0
    %227 = vmatpush1.msra.mxu0 %v67
    %228 = vmatprep.subr.mxu0 0.0
    %229 = vmatpush1.msra.mxu0 %v68
    %230 = vmatprep.subr.mxu0 0.0
    %231 = vmatpush1.msra.mxu0 %v69
    %232 = vmatprep.subr.mxu0 0.0
    %233 = vmatpush1.msra.mxu0 %v70
    %234 = vmatprep.subr.mxu0 0.0
    %235 = vmatpush1.msra.mxu0 %v71
    %236 = vmatprep.subr.mxu0 0.0
    %237 = vmatpush1.msra.mxu0 %v72
    %238 = vmatprep.subr.mxu0 0.0
    %239 = vmatpush1.msra.mxu0 %v73
    %240 = vmatprep.subr.mxu0 0.0
    %241 = vmatpush1.msra.mxu0 %v74
    %242 = vmatprep.mubr.f32.mxu0 %v36
    %243 = vmatmul.mubr.f32.gmra.mrb[0].mxu0 %v35
    %v244 = vpop.f32.mrb[0].mxu0
    %v245 = vadd.f32 %v176, %v244
    %v246 = vpop.f32.mrb[0].mxu0
    %247 = vdwg.mxu0
    %248 = vmatprep.subr.mxu0 0.0
    %249 = vmatpush1.msra.mxu0 %v75
    %250 = vmatprep.subr.mxu0 0.0
    %251 = vmatpush1.msra.mxu0 %v76
    %252 = vmatprep.subr.mxu0 0.0
    %253 = vmatpush1.msra.mxu0 %v77
    %254 = vmatprep.subr.mxu0 0.0
    %255 = vmatpush1.msra.mxu0 %v78
    %256 = vmatprep.subr.mxu0 0.0
    %257 = vmatpush1.msra.mxu0 %v79
    %258 = vmatprep.subr.mxu0 0.0
    %259 = vmatpush1.msra.mxu0 %v80
    %260 = vmatprep.subr.mxu0 0.0
    %261 = vmatpush1.msra.mxu0 %v81
    %262 = vmatprep.subr.mxu0 0.0
    %263 = vmatpush1.msra.mxu0 %v82
    %264 = vmatprep.subr.mxu0 0.0
    %265 = vmatpush1.msra.mxu0 %v83
    %266 = vmatprep.subr.mxu0 0.0
    %267 = vmatpush1.msra.mxu0 %v84
    %268 = vmatprep.subr.mxu0 0.0
    %269 = vmatpush1.msra.mxu0 %v85
    %270 = vmatprep.subr.mxu0 0.0
    %271 = vmatpush1.msra.mxu0 %v86
    %272 = vmatprep.subr.mxu0 0.0
    %273 = vmatpush1.msra.mxu0 %v87
    %274 = vmatprep.subr.mxu0 0.0
    %275 = vmatpush1.msra.mxu0 %v88
    %276 = vmatprep.subr.mxu0 0.0
    %277 = vmatpush1.msra.mxu0 %v89
    %278 = vmatprep.subr.mxu0 0.0
    %279 = vmatpush1.msra.mxu0 %v90
    %280 = vmatprep.subr.mxu0 0.0
    %281 = vmatpush1.msra.mxu0 %v91
    %282 = vmatprep.subr.mxu0 0.0
    %283 = vmatpush1.msra.mxu0 %v92
    %284 = vmatprep.subr.mxu0 0.0
    %285 = vmatpush1.msra.mxu0 %v93
    %286 = vmatprep.subr.mxu0 0.0
    %287 = vmatpush1.msra.mxu0 %v94
    %288 = vmatprep.subr.mxu0 0.0
    %289 = vmatpush1.msra.mxu0 %v95
    %290 = vmatprep.subr.mxu0 0.0
    %291 = vmatpush1.msra.mxu0 %v96
    %292 = vmatprep.subr.mxu0 0.0
    %293 = vmatpush1.msra.mxu0 %v97
    %294 = vmatprep.subr.mxu0 0.0
    %295 = vmatpush1.msra.mxu0 %v98
    %296 = vmatprep.subr.mxu0 0.0
    %297 = vmatpush1.msra.mxu0 %v99
    %298 = vmatprep.subr.mxu0 0.0
    %299 = vmatpush1.msra.mxu0 %v100
    %300 = vmatprep.subr.mxu0 0.0
    %301 = vmatpush1.msra.mxu0 %v101
    %302 = vmatprep.subr.mxu0 0.0
    %303 = vmatpush1.msra.mxu0 %v102
    %304 = vmatprep.subr.mxu0 0.0
    %305 = vmatpush1.msra.mxu0 %v103
    %306 = vmatprep.subr.mxu0 0.0
    %307 = vmatpush1.msra.mxu0 %v104
    %308 = vmatprep.subr.mxu0 0.0
    %309 = vmatpush1.msra.mxu0 %v105
    %310 = vmatprep.subr.mxu0 0.0
    %311 = vmatpush1.msra.mxu0 %v106
    %312 = vmatprep.mubr.f32.mxu0 %v38
    %313 = vmatmul.mubr.f32.gmra.mrb[0].mxu0 %v37
    %v314 = vpop.f32.mrb[0].mxu0
    %v315 = vadd.f32 %v245, %v314
    %v316 = vpop.f32.mrb[0].mxu0
    %317 = vdwg.mxu0
    %318 = vmatprep.subr.mxu0 0.0
    %319 = vmatpush1.msra.mxu0 %v107
    %320 = vmatprep.subr.mxu0 0.0
    %321 = vmatpush1.msra.mxu0 %v108
    %322 = vmatprep.subr.mxu0 0.0
    %323 = vmatpush1.msra.mxu0 %v109
    %324 = vmatprep.subr.mxu0 0.0
    %325 = vmatpush1.msra.mxu0 %v110
    %326 = vmatprep.subr.mxu0 0.0
    %327 = vmatpush1.msra.mxu0 %v111
    %328 = vmatprep.subr.mxu0 0.0
    %329 = vmatpush1.msra.mxu0 %v112
    %330 = vmatprep.subr.mxu0 0.0
    %331 = vmatpush1.msra.mxu0 %v113
    %332 = vmatprep.subr.mxu0 0.0
    %333 = vmatpush1.msra.mxu0 %v114
    %334 = vmatprep.subr.mxu0 0.0
    %335 = vmatpush1.msra.mxu0 %v115
    %336 = vmatprep.subr.mxu0 0.0
    %337 = vmatpush1.msra.mxu0 %v116
    %338 = vmatprep.subr.mxu0 0.0
    %339 = vmatpush1.msra.mxu0 %v117
    %340 = vmatprep.subr.mxu0 0.0
    %341 = vmatpush1.msra.mxu0 %v118
    %342 = vmatprep.subr.mxu0 0.0
    %343 = vmatpush1.msra.mxu0 %v119
    %344 = vmatprep.subr.mxu0 0.0
    %345 = vmatpush1.msra.mxu0 %v120
    %346 = vmatprep.subr.mxu0 0.0
    %347 = vmatpush1.msra.mxu0 %v121
    %348 = vmatprep.subr.mxu0 0.0
    %349 = vmatpush1.msra.mxu0 %v122
    %350 = vmatprep.subr.mxu0 0.0
    %351 = vmatpush1.msra.mxu0 %v123
    %352 = vmatprep.subr.mxu0 0.0
    %353 = vmatpush1.msra.mxu0 %v124
    %354 = vmatprep.subr.mxu0 0.0
    %355 = vmatpush1.msra.mxu0 %v125
    %356 = vmatprep.subr.mxu0 0.0
    %357 = vmatpush1.msra.mxu0 %v126
    %358 = vmatprep.subr.mxu0 0.0
    %359 = vmatpush1.msra.mxu0 %v127
    %360 = vmatprep.subr.mxu0 0.0
    %361 = vmatpush1.msra.mxu0 %v128
    %362 = vmatprep.subr.mxu0 0.0
    %363 = vmatpush1.msra.mxu0 %v129
    %364 = vmatprep.subr.mxu0 0.0
    %365 = vmatpush1.msra.mxu0 %v130
    %366 = vmatprep.subr.mxu0 0.0
    %367 = vmatpush1.msra.mxu0 %v131
    %368 = vmatprep.subr.mxu0 0.0
    %369 = vmatpush1.msra.mxu0 %v132
    %370 = vmatprep.subr.mxu0 0.0
    %371 = vmatpush1.msra.mxu0 %v133
    %372 = vmatprep.subr.mxu0 0.0
    %373 = vmatpush1.msra.mxu0 %v134
    %374 = vmatprep.subr.mxu0 0.0
    %375 = vmatpush1.msra.mxu0 %v135
    %376 = vmatprep.subr.mxu0 0.0
    %377 = vmatpush1.msra.mxu0 %v136
    %378 = vmatprep.subr.mxu0 0.0
    %379 = vmatpush1.msra.mxu0 %v137
    %380 = vmatprep.subr.mxu0 0.0
    %381 = vmatpush1.msra.mxu0 %v138
    %382 = vmatprep.mubr.f32.mxu0 %v40
    %383 = vmatmul.mubr.f32.gmra.mrb[0].mxu0 %v39
    %v384 = vpop.f32.mrb[0].mxu0
    %v385 = vadd.f32 %v315, %v384
    %v386 = vpop.f32.mrb[0].mxu0
    %387 = vdwg.mxu0
    %388 = vmatprep.subr.mxu0 0.0
    %389 = vmatpush1.msra.mxu0 %v139
    %390 = vmatprep.subr.mxu0 0.0
    %391 = vmatpush1.msra.mxu0 %v140
    %392 = vmatprep.subr.mxu0 0.0
    %393 = vmatpush1.msra.mxu0 %v141
    %394 = vmatprep.subr.mxu0 0.0
    %395 = vmatpush1.msra.mxu0 %v142
    %396 = vmatprep.subr.mxu0 0.0
    %397 = vmatpush1.msra.mxu0 %v143
    %398 = vmatprep.subr.mxu0 0.0
    %399 = vmatpush1.msra.mxu0 %v144
    %400 = vmatprep.subr.mxu0 0.0
    %401 = vmatpush1.msra.mxu0 %v145
    %402 = vmatprep.subr.mxu0 0.0
    %403 = vmatpush1.msra.mxu0 %v146
    %404 = vmatprep.subr.mxu0 0.0
    %405 = vmatpush1.msra.mxu0 %v147
    %406 = vmatprep.subr.mxu0 0.0
    %407 = vmatpush1.msra.mxu0 %v148
    %408 = vmatprep.subr.mxu0 0.0
    %409 = vmatpush1.msra.mxu0 %v149
    %410 = vmatprep.subr.mxu0 0.0
    %411 = vmatpush1.msra.mxu0 %v150
    %412 = vmatprep.subr.mxu0 0.0
    %413 = vmatpush1.msra.mxu0 %v151
    %414 = vmatprep.subr.mxu0 0.0
    %415 = vmatpush1.msra.mxu0 %v152
    %416 = vmatprep.subr.mxu0 0.0
    %417 = vmatpush1.msra.mxu0 %v153
    %418 = vmatprep.subr.mxu0 0.0
    %419 = vmatpush1.msra.mxu0 %v154
    %420 = vmatprep.subr.mxu0 0.0
    %421 = vmatpush1.msra.mxu0 %v155
    %422 = vmatprep.subr.mxu0 0.0
    %423 = vmatpush1.msra.mxu0 %v156
    %424 = vmatprep.subr.mxu0 0.0
    %425 = vmatpush1.msra.mxu0 %v157
    %426 = vmatprep.subr.mxu0 0.0
    %427 = vmatpush1.msra.mxu0 %v158
    %428 = vmatprep.subr.mxu0 0.0
    %429 = vmatpush1.msra.mxu0 %v159
    %430 = vmatprep.subr.mxu0 0.0
    %431 = vmatpush1.msra.mxu0 %v160
    %432 = vmatprep.subr.mxu0 0.0
    %433 = vmatpush1.msra.mxu0 %v161
    %434 = vmatprep.subr.mxu0 0.0
    %435 = vmatpush1.msra.mxu0 %v162
    %436 = vmatprep.subr.mxu0 0.0
    %437 = vmatpush1.msra.mxu0 %v163
    %438 = vmatprep.subr.mxu0 0.0
    %439 = vmatpush1.msra.mxu0 %v164
    %440 = vmatprep.subr.mxu0 0.0
    %441 = vmatpush1.msra.mxu0 %v165
    %442 = vmatprep.subr.mxu0 0.0
    %443 = vmatpush1.msra.mxu0 %v166
    %444 = vmatprep.subr.mxu0 0.0
    %445 = vmatpush1.msra.mxu0 %v167
    %446 = vmatprep.subr.mxu0 0.0
    %447 = vmatpush1.msra.mxu0 %v168
    %448 = vmatprep.subr.mxu0 0.0
    %449 = vmatpush1.msra.mxu0 %v169
    %450 = vmatprep.subr.mxu0 0.0
    %451 = vmatpush1.msra.mxu0 %v170
    %452 = vmatprep.mubr.f32.mxu0 %v42
    %453 = vmatmul.mubr.f32.gmra.mrb[0].mxu0 %v41
    %v454 = vpop.f32.mrb[0].mxu0
    %v455 = vadd.f32 %v385, %v454
    %v456 = vpop.f32.mrb[0].mxu0
    %457 = vdwg.mxu0
    %v458 = vmax.f32 %v455, 0.0
    %v459 = vld [vmem:[%s3] sm:$0xff]
    %v460 = vld [vmem:[%s3 + $0x8] sm:$0xff]
    %v461 = vld [vmem:[%s3 + $0x10] sm:$0xff]
    %v462 = vld [vmem:[%s3 + $0x18] sm:$0xff]
    %v463 = vld [vmem:[%s3 + $0x20] sm:$0xff]
    %v464 = vld [vmem:[%s3 + $0x28] sm:$0xff]
    %v465 = vld [vmem:[%s3 + $0x30] sm:$0xff]
    %v466 = vld [vmem:[%s3 + $0x38] sm:$0xff]
    %v467 = vld [vmem:[%s3 + $0x40] sm:$0xff]
    %v468 = vld [vmem:[%s3 + $0x48] sm:$0xff]
    %v469 = vld [vmem:[%s3 + $0x50] sm:$0xff]
    %v470 = vld [vmem:[%s3 + $0x58] sm:$0xff]
    %v471 = vld [vmem:[%s3 + $0x60] sm:$0xff]
    %v472 = vld [vmem:[%s3 + $0x68] sm:$0xff]
    %v473 = vld [vmem:[%s3 + $0x70] sm:$0xff]
    %v474 = vld [vmem:[%s3 + $0x78] sm:$0xff]
    %v475 = vld [vmem:[%s4] sm:$0x1]
    %v477 = vlaneseq
    %v478 = vshrl.u32 %v477, 7
    %v479 = vsub.s32 0, %v478
    %v480 = vrot.slane %v475, %v479
    %482 = vmatprep.subr.mxu0 0.0
    %483 = vmatpush1.msra.mxu0 %v459
    %484 = vmatprep.subr.mxu0 0.0
    %485 = vmatpush1.msra.mxu0 %v460
    %486 = vmatprep.subr.mxu0 0.0
    %487 = vmatpush1.msra.mxu0 %v461
    %488 = vmatprep.subr.mxu0 0.0
    %489 = vmatpush1.msra.mxu0 %v462
    %490 = vmatprep.subr.mxu0 0.0
    %491 = vmatpush1.msra.mxu0 %v463
    %492 = vmatprep.subr.mxu0 0.0
    %493 = vmatpush1.msra.mxu0 %v464
    %494 = vmatprep.subr.mxu0 0.0
    %495 = vmatpush1.msra.mxu0 %v465
    %496 = vmatprep.subr.mxu0 0.0
    %497 = vmatpush1.msra.mxu0 %v466
    %498 = vmatprep.subr.mxu0 0.0
    %499 = vmatpush1.msra.mxu0 %v467
    %500 = vmatprep.subr.mxu0 0.0
    %501 = vmatpush1.msra.mxu0 %v468
    %502 = vmatprep.subr.mxu0 0.0
    %503 = vmatpush1.msra.mxu0 %v469
    %504 = vmatprep.subr.mxu0 0.0
    %505 = vmatpush1.msra.mxu0 %v470
    %506 = vmatprep.subr.mxu0 0.0
    %507 = vmatpush1.msra.mxu0 %v471
    %508 = vmatprep.subr.mxu0 0.0
    %509 = vmatpush1.msra.mxu0 %v472
    %510 = vmatprep.subr.mxu0 0.0
    %511 = vmatpush1.msra.mxu0 %v473
    %512 = vmatprep.subr.mxu0 0.0
    %513 = vmatpush1.msra.mxu0 %v474
    %514 = vmatprep.subr.mxu0 0.0
    %515 = vmatpush1.msra.mxu0 0.0
    %516 = vmatprep.subr.mxu0 0.0
    %517 = vmatpush1.msra.mxu0 0.0
    %518 = vmatprep.subr.mxu0 0.0
    %519 = vmatpush1.msra.mxu0 0.0
    %520 = vmatprep.subr.mxu0 0.0
    %521 = vmatpush1.msra.mxu0 0.0
    %522 = vmatprep.subr.mxu0 0.0
    %523 = vmatpush1.msra.mxu0 0.0
    %524 = vmatprep.subr.mxu0 0.0
    %525 = vmatpush1.msra.mxu0 0.0
    %526 = vmatprep.subr.mxu0 0.0
    %527 = vmatpush1.msra.mxu0 0.0
    %528 = vmatprep.subr.mxu0 0.0
    %529 = vmatpush1.msra.mxu0 0.0
    %530 = vmatprep.subr.mxu0 0.0
    %531 = vmatpush1.msra.mxu0 0.0
    %532 = vmatprep.subr.mxu0 0.0
    %533 = vmatpush1.msra.mxu0 0.0
    %534 = vmatprep.subr.mxu0 0.0
    %535 = vmatpush1.msra.mxu0 0.0
    %536 = vmatprep.subr.mxu0 0.0
    %537 = vmatpush1.msra.mxu0 0.0
    %538 = vmatprep.subr.mxu0 0.0
    %539 = vmatpush1.msra.mxu0 0.0
    %540 = vmatprep.subr.mxu0 0.0
    %541 = vmatpush1.msra.mxu0 0.0
    %542 = vmatprep.subr.mxu0 0.0
    %543 = vmatpush1.msra.mxu0 0.0
    %544 = vmatprep.subr.mxu0 0.0
    %545 = vmatpush1.msra.mxu0 0.0
    %546 = vmatprep.mubr.f32.mxu0 0.0
    %547 = vmatmul.mubr.f32.gmra.mrb[0].mxu0 %v458
    %v548 = vpop.f32.mrb[0].mxu0
    %v549 = vadd.f32 %v480, %v548
    %v550 = vpop.f32.mrb[0].mxu0
    %551 = vdwg.mxu0
    %vm552 = vcmask 130048
    %v553 = vsel %vm552, %v549, -inf
    %554 = vmax.xlane.f32.xlu0 %v553
    %v555 = vpop.xlane.xlu0 %554
    %v556 = vsub.f32 %v549, %v555
    %v557 = vmul.f32 %v556, 1.442695
    %v558 = vpow.pop %v557
    %v559 = vsel %vm552, %v558, 0.0
    %560 = vadd.xlane.f32.xlu0 %v559
    %v561 = vpop.xlane.xlu0 %560
    %v562 = vrcp.pop %v561
    %v563 = vmul.f32 %v558, %v562
    %564 = vst.msk [vmem:[#allocation5] sm:$0xff] %vm552, %v563
    // Predicated region
    $region26: #{tpu_custom_call.1} parent=1 // pred_check
      _
    $region27: #{tpu_custom_call.1} parent=1 // pred_check_branch
      %566 = sbr.rel (0) target = $region29
    $region28: #{tpu_custom_call.1} parent=1 // pred_region
      %s568 = ssub.s32 128, 128
      %569 = vsyncadd [#allocation4], %s568
      %s571 = sshll.u32 [#allocation5], 4
      %s572 = int_to_ptr.vmem [resolvable:$true] %s571
      %574 = dma.vmem_to_hbm [thread:$0]  %s572, 128, %s5, [#allocation4]
    $region29: #{tpu_custom_call.1} parent=1 // pred_fallthru
      _
    // Predicated region
    $region30: #{tpu_custom_call.1} parent=1 // pred_check
      _
    $region31: #{tpu_custom_call.1} parent=1 // pred_check_branch
      %576 = sbr.rel (0) target = $region33
    $region32: #{tpu_custom_call.1} parent=1 // pred_region
      %577 = dma.done [#allocation4], 128
    $region33: #{tpu_custom_call.1} parent=1 // pred_fallthru
      _
    %578 = vsyncpa [#allocation3], 1
    %579 = vsyncpa [#allocation4], 1

</llo_original>
